<compile_context>
chip_gen: v7x
topology: tpu7x:2x2x1
jax: 0.10.0
libtpu: 0.0.40
codegen_flags: <defaults>
</compile_context>

<pallas_src>
import jax
import jax.numpy as jnp
from jax.experimental import pallas as pl
from jax.experimental.pallas import tpu as pltpu


def _avgpool2x2_kernel(x2_ref, pw_ref, o_ref):
    # x2_ref: (TM, 2W) — TM row-pairs; [:, :W] is the even input row, [:, W:] the odd.
    # pw_ref: (W, Wo)  — lane-compaction matrix, pw[r, c] = 0.25 iff r // 2 == c.
    # o_ref : (TM, Wo)
    w = pw_ref.shape[0]
    s = x2_ref[:, :w] + x2_ref[:, w:]          # VPU row-pair sum (free VALU slot)
    o_ref[...] = jnp.dot(
        s, pw_ref[...], preferred_element_type=jnp.float32
    ).astype(o_ref.dtype)


def downsample2d(x):
    """AvgPool2d(kernel=2, stride=2) on an NCHW tensor via a Pallas TPU kernel."""
    B, C, H, W = x.shape
    assert H % 2 == 0 and W % 2 == 0, "AvgPool2d(2) with no padding needs even H, W"
    Ho, Wo = H // 2, W // 2
    M = B * C * Ho                       # one output row per input row-pair
    K = 2 * W                            # one X2 row = a pair of adjacent input rows

    # Contiguous (bitcast) view: row m of x2 = rows (2i, 2i+1) of plane (b, c),
    # m = (b*C + c)*Ho + i.
    x2 = x.reshape(M, K)

    # Half-size pooling matrix Pw: (W, Wo), Pw[r, c] = 0.25 iff r // 2 == c.
    r = jnp.arange(W)[:, None]
    c = jnp.arange(Wo)[None, :]
    pw = ((r // 2) == c).astype(x.dtype) * jnp.asarray(0.25, x.dtype)

    itemsize = jnp.dtype(x.dtype).itemsize
    pw_bytes = W * Wo * itemsize

    # ---- block-row (tm) selection: fixed, sublane-aligned, cdiv grid --------
    sub = max(8, 32 // itemsize)                 # 8 (f32), 16 (bf16), 32 (int8/fp8)
    row_bytes = (K + Wo) * itemsize              # input + output bytes per row

    # VMEM working set = 2x input block + 2x output block (double-buffered)
    # + resident Pw; keep it <= ~24 MiB (>30% headroom under the 40 MiB limit,
    # safe on v7x's 64 MiB physical VMEM).
    vmem_budget = 24 * 1024 * 1024
    if vmem_budget > pw_bytes:
        tm_vmem = max(sub, (vmem_budget - pw_bytes) // (2 * row_bytes))
    else:
        tm_vmem = sub

    # ~4 MiB of input per grid step: per-step overhead (~0.35 us) stays <1%
    # while the grid keeps many steps for pipeline overlap / megacore.
    tm_target = max(sub, (4 * 1024 * 1024) // (K * itemsize))

    tm = min(tm_vmem, tm_target)
    tm = max(sub, (tm // sub) * sub)

    # Prefer >= 4 grid steps when the problem is big enough (2 TCs on v7x).
    min_steps = 4
    if M >= min_steps * sub:
        cap = max(sub, (M // min_steps) // sub * sub)
        tm = min(tm, cap)

    if tm >= M:
        tm = M                                   # full extent: always a legal block dim

    grid = (pl.cdiv(M, tm),)

    out2 = pl.pallas_call(
        _avgpool2x2_kernel,
        out_shape=jax.ShapeDtypeStruct((M, Wo), x.dtype),
        grid_spec=pltpu.PrefetchScalarGridSpec(
            num_scalar_prefetch=0,
            grid=grid,
            in_specs=[
                pl.BlockSpec((tm, K), lambda i: (i, 0)),
                # Whole Pw resident in VMEM once — not part of the pipeline,
                # so no double-buffering of the constant operand.
                pl.BlockSpec(memory_space=pltpu.MemorySpace.VMEM),
            ],
            out_specs=pl.BlockSpec((tm, Wo), lambda i: (i, 0)),
        ),
        compiler_params=pltpu.CompilerParams(
            dimension_semantics=("parallel",),
            vmem_limit_bytes=40 * 1024 * 1024,
        ),
    )(x2, pw)

    # Contiguous (bitcast) view back to NCHW.
    return out2.reshape(B, C, Ho, Wo)


if __name__ == "__main__":
    key = jax.random.PRNGKey(0)
    B, C, H, W = 2, 4, 16, 16
    x = jax.random.normal(key, (B, C, H, W), dtype=jnp.float32)

    out = jax.block_until_ready(downsample2d(x))

    # Pure-JAX reference: mean over non-overlapping 2x2 windows.
    ref = jnp.mean(x.reshape(B, C, H // 2, 2, W // 2, 2), axis=(3, 5))

    assert out.shape == (B, C, H // 2, W // 2), out.shape
    assert out.dtype == x.dtype, out.dtype
    assert jnp.allclose(out, ref, atol=1e-5, rtol=1e-5), "mismatch vs reference"

    print("KERNEL_OK")
</pallas_src>

<mosaic_0001>
module attributes {stable_mosaic.version = 11 : i64} {
  func.func @_avgpool2x2_kernel(%arg0: i32, %arg1: memref<16x32xf32, #tpu.memory_space<vmem>>, %arg2: memref<16x8xf32, #tpu.memory_space<vmem>>, %arg3: memref<16x8xf32, #tpu.memory_space<vmem>>) attributes {dimension_semantics = [#tpu.dimension_semantics<parallel>], iteration_bounds = array<i64: 4>, scalar_prefetch = 0 : i64, scratch_operands = 0 : i64, tpu.core_type = #tpu.core_type<tc>, window_params = [{transform_indices = @transform_0, window_bounds = array<i64: 16, 32>}, {pipeline_mode = #tpu.pipeline_mode<synchronous>, transform_indices = @transform_1, window_bounds = array<i64: 16, 8>}, {transform_indices = @transform_2, window_bounds = array<i64: 16, 8>}]} {
    %c0 = arith.constant 0 : index
    %c0_0 = arith.constant 0 : index
    %0 = vector.load %arg1[%c0, %c0_0] : memref<16x32xf32, #tpu.memory_space<vmem>>, vector<16x16xf32>
    %c0_1 = arith.constant 0 : index
    %c16 = arith.constant 16 : index
    %1 = vector.load %arg1[%c0_1, %c16] : memref<16x32xf32, #tpu.memory_space<vmem>>, vector<16x16xf32>
    %2 = arith.addf %0, %1 : vector<16x16xf32>
    %c0_2 = arith.constant 0 : index
    %c0_3 = arith.constant 0 : index
    %3 = vector.load %arg2[%c0_2, %c0_3] : memref<16x8xf32, #tpu.memory_space<vmem>>, vector<16x8xf32>
    %cst = arith.constant dense<0.000000e+00> : vector<16x8xf32>
    %4 = tpu.matmul %2, %3, %cst {dimension_numbers = #tpu.dot_dimension_numbers<[1], [0], [0], [1], [0, 0, 1, 1], [], []>} : vector<16x16xf32>, vector<16x8xf32>, vector<16x8xf32> -> vector<16x8xf32>
    %c0_4 = arith.constant 0 : index
    %c0_5 = arith.constant 0 : index
    %5 = vector.load %arg3[%c0_4, %c0_5] : memref<16x8xf32, #tpu.memory_space<vmem>>, vector<16x8xf32>
    tpu.vector_store %arg3[%c0_4, %c0_5], %4 {strides = array<i32>} : memref<16x8xf32, #tpu.memory_space<vmem>>, vector<16x8xf32>,
    return
  }
  func.func @transform_0(%arg0: i32) -> (i32, i32) {
    %c0_i32 = arith.constant 0 : i32
    %c0_i32_0 = arith.constant 0 : i32
    return %arg0, %c0_i32 : i32, i32
  }
  func.func @transform_1(%arg0: i32) -> (i32, i32) {
    %c0_i32 = arith.constant 0 : i32
    %c0_i32_0 = arith.constant 0 : i32
    %c0_i32_1 = arith.constant 0 : i32
    return %c0_i32, %c0_i32_0 : i32, i32
  }
  func.func @transform_2(%arg0: i32) -> (i32, i32) {
    %c0_i32 = arith.constant 0 : i32
    %c0_i32_0 = arith.constant 0 : i32
    return %arg0, %c0_i32 : i32, i32
  }
}

</mosaic_0001>

<llo_original>
// kernel: tpu_custom_call.1
$region0: #{tpu_custom_call.1}
  #allocation0 [shape = 'u32[]', space=smem, size = 0x4, offset = 0x4, fixed_abs, tag = 'smem constant byte address 0x4 - core index']
  #allocation1 [shape = 'u32[144,128]{1,0:T(1,128)}', space=vmem, size = 0x12000, scoped, tag = 'internal scratch']
  %s0 = inlined_call_operand.vmem [shape: f32[64,32], index: 0, kind: input, shape index: {}]
  %s1 = inlined_call_operand.vmem [shape: f32[16,8], index: 1, kind: input, shape index: {}]
  %s2 = inlined_call_operand.vmem [shape: f32[64,8], index: 2, kind: output, shape index: {}]
  %s3 = sld [smem:[#allocation0]]
  $region41: #{tpu_custom_call.1} parent=0
    _
  %s5 = ssub.s32 1, %s3
  %s6 = scalar_select 0, %s5, %s3
  loop: start=0, step=1, limit=6
  $region2: #{tpu_custom_call.1} parent=0 // loop_pre_header
    _
  $region3: #{tpu_custom_call.1} parent=0 // loop_header
    %s8 = sphi 0, %s12
    %p9 = scmp.ge.s32.totalorder %s8, 6
    %s18 = sphi 0, %s20
    %s21 = sphi 0, %s18
    %s22 = sphi 0, %s21
    %s38 = sphi 0, %s22
    %s42 = sphi 0, %s42
    %s44 = sphi 0, %s42
    %s45 = sphi 0, %s44
    %s59 = sphi 0, %s45
    %s65 = sphi 0, %s67
    %s68 = sphi 0, %s65
    %s69 = sphi 0, %s68
    %s85 = sphi 0, %s69
  $region4: #{tpu_custom_call.1} parent=0 // loop_header_branch
    %11 = sbr.rel (%p9) target = $region8
  $region5: #{tpu_custom_call.1} parent=0 // loop_body
    %s13 = ssub.s32 %s8, 1
    %s14 = ssub.s32 %s8, 2
    %s15 = sadd.s32 %s8, 1
    %s16 = ssub.s32 %s8, %s15
    %p17 = scmp.eq.s32.totalorder %s16, 0
    %s19 = sadd.s32 %s18, 1
    %s20 = scalar_select %p17, %s18, %s19
    %p23 = pneg %p17
    %p24 = scmp.eq.s32.totalorder %s8, 3
    %p25 = por %p23, %p24
    %p26 = scmp.ne.s32.totalorder %s18, %s21
    %p27 = scmp.eq.s32.totalorder %s8, 0
    %p28 = por %p26, %p27
    %p29 = scmp.ne.s32.totalorder %s18, %s21
    %p30 = scmp.eq.s32.totalorder %s13, 3
    %p31 = por %p29, %p30
    %p32 = scmp.ne.s32.totalorder %s21, %s22
    %p33 = scmp.eq.s32.totalorder %s13, 0
    %p34 = por %p32, %p33
    %p35 = scmp.ne.s32.totalorder %s21, %s22
    %p36 = scmp.eq.s32.totalorder %s14, 3
    %p37 = por %p35, %p36
    %p39 = scmp.ne.s32.totalorder %s22, %s38
    %p40 = scmp.eq.s32.totalorder %s14, 0
    %p41 = por %p39, %p40
    %s43 = sadd.s32 %s42, 1
    %p46 = scmp.eq.s32.totalorder %s8, 3
    %p47 = scmp.ne.s32.totalorder %s42, %s44
    %p48 = scmp.eq.s32.totalorder %s8, 0
    %p49 = por %p47, %p48
    %p50 = scmp.ne.s32.totalorder %s42, %s44
    %p51 = scmp.eq.s32.totalorder %s13, 3
    %p52 = por %p50, %p51
    %p53 = scmp.ne.s32.totalorder %s44, %s45
    %p54 = scmp.eq.s32.totalorder %s13, 0
    %p55 = por %p53, %p54
    %p56 = scmp.ne.s32.totalorder %s44, %s45
    %p57 = scmp.eq.s32.totalorder %s14, 3
    %p58 = por %p56, %p57
    %p60 = scmp.ne.s32.totalorder %s45, %s59
    %p61 = scmp.eq.s32.totalorder %s14, 0
    %p62 = por %p60, %p61
    %s63 = ssub.s32 %s8, %s15
    %p64 = scmp.eq.s32.totalorder %s63, 0
    %s66 = sadd.s32 %s65, 1
    %s67 = scalar_select %p64, %s65, %s66
    %p70 = pneg %p64
    %p71 = scmp.eq.s32.totalorder %s8, 3
    %p72 = por %p70, %p71
    %p73 = scmp.ne.s32.totalorder %s65, %s68
    %p74 = scmp.eq.s32.totalorder %s8, 0
    %p75 = por %p73, %p74
    %p76 = scmp.ne.s32.totalorder %s65, %s68
    %p77 = scmp.eq.s32.totalorder %s13, 3
    %p78 = por %p76, %p77
    %p79 = scmp.ne.s32.totalorder %s68, %s69
    %p80 = scmp.eq.s32.totalorder %s13, 0
    %p81 = por %p79, %p80
    %p82 = scmp.ne.s32.totalorder %s68, %s69
    %p83 = scmp.eq.s32.totalorder %s14, 3
    %p84 = por %p82, %p83
    %p86 = scmp.ne.s32.totalorder %s69, %s85
    %p87 = scmp.eq.s32.totalorder %s14, 0
    %p88 = por %p86, %p87
    %p89 = scmp.le.s32.totalorder 1, %s8
    %p90 = scmp.lt.s32.totalorder %s8, 5
    %p91 = pnand %p89, %p90
    %p92 = pneg %p91
    // Predicated region
    $region9: #{tpu_custom_call.1} parent=5 // pred_check
      _
    $region10: #{tpu_custom_call.1} parent=5 // pred_check_branch
      %94 = sbr.rel (%p91) target = $region12
    $region11: #{tpu_custom_call.1} parent=5 // pred_region
      %s95 = ssub.s32 %s8, 1
      // Predicated region
      $region13: #{tpu_custom_call.1} parent=11 // pred_check
        %p96 = pneg %p55
      $region14: #{tpu_custom_call.1} parent=11 // pred_check_branch
        %98 = sbr.rel (%p96) target = $region16
      $region15: #{tpu_custom_call.1} parent=11 // pred_region
        _
      $region16: #{tpu_custom_call.1} parent=11 // pred_fallthru
        _
    $region12: #{tpu_custom_call.1} parent=5 // pred_fallthru
      _
    %p99 = scmp.lt.s32.totalorder %s8, 4
    // Predicated region
    $region17: #{tpu_custom_call.1} parent=5 // pred_check
      %p100 = pneg %p99
    $region18: #{tpu_custom_call.1} parent=5 // pred_check_branch
      %102 = sbr.rel (%p100) target = $region20
    $region19: #{tpu_custom_call.1} parent=5 // pred_region
      // Predicated region
      $region21: #{tpu_custom_call.1} parent=19 // pred_check
        %p103 = pneg %p28
      $region22: #{tpu_custom_call.1} parent=19 // pred_check_branch
        %105 = sbr.rel (%p103) target = $region24
      $region23: #{tpu_custom_call.1} parent=19 // pred_region
        %s106 = smul.u32 2, %s8
        %p107 = scmp.lt.s32.totalorder %s106, 7
        %s108 = scalar_select %p107, %s106, 7
        %s109 = smul.addr %s108, 8
        %s110 = scalar_lea.vmem %s0, %s109
        %s111 = smul.u32 2, %s8
      $region24: #{tpu_custom_call.1} parent=19 // pred_fallthru
        _
    $region20: #{tpu_custom_call.1} parent=5 // pred_fallthru
      _
    %p112 = scmp.le.s32.totalorder 1, %s8
    %p113 = scmp.lt.s32.totalorder %s8, 5
    %p114 = pnand %p112, %p113
    %p115 = pneg %p114
    // Predicated region
    $region25: #{tpu_custom_call.1} parent=5 // pred_check
      _
    $region26: #{tpu_custom_call.1} parent=5 // pred_check_branch
      %117 = sbr.rel (%p114) target = $region28
    $region27: #{tpu_custom_call.1} parent=5 // pred_region
      %s118 = ssub.s32 %s8, 1
      %s119 = smul.u32 2, %s13
      %p120 = scmp.lt.s32.totalorder %s119, 7
      %s121 = scalar_select %p120, %s119, 7
      %s122 = smul.addr %s121, 8
      %s123 = scalar_lea.vmem %s0, %s122
      %p124 = pneg %p34
      %p125 = pneg %p31
      %p126 = pneg %p55
      %p127 = pneg %p52
      %p128 = pneg %p81
      %p129 = pneg %p78
      %s130 = smul.u32 2, %s13
      %p131 = scmp.lt.s32.totalorder %s130, 7
      %s132 = scalar_select %p131, %s130, 7
      %s133 = smul.addr %s132, 8
      %s134 = scalar_lea.vmem %s2, %s133
      %s135 = smul.u32 2, %s13
      %p136 = scmp.lt.s32.totalorder %s135, 7
      %s137 = scalar_select %p136, %s135, 7
      %s138 = smul.addr %s137, 8
      %s139 = scalar_lea.vmem %s0, %s138
      %s140 = smul.u32 2, %s13
      %s141 = smul.u32 2, %s13
      %p142 = scmp.lt.s32.totalorder %s141, 7
      %s143 = scalar_select %p142, %s141, 7
      %s144 = smul.addr %s143, 8
      %s145 = scalar_lea.vmem %s2, %s144
      %s146 = smul.u32 2, %s13
      %v147 = vld [vmem:[%s139] sm:$0xff]
      %v148 = vld [vmem:[%s139 + $0x8] sm:$0xff]
      %151 = vrot.lane.b32.xlu0 %v147, 112
      %v152 = vpop.permute.xlu0 %151
      %153 = vrot.lane.b32.xlu0 %v148, 112
      %v154 = vpop.permute.xlu0 %153
      %v157 = vadd.f32 %v147, %v152
      %v158 = vadd.f32 %v148, %v154
      %v159 = vld [vmem:[%s1] sm:$0xff]
      %v160 = vld [vmem:[%s1 + $0x8] sm:$0xff]
      %vm161 = vcmask 130048
      %v163 = vsel %vm161, %v157, 0
      %v166 = vsel %vm161, %v158, 0
      %168 = vmatprep.subr.mxu0 0.0
      %169 = vmatpush1.msra.mxu0 %v159
      %170 = vmatprep.subr.mxu0 0.0
      %171 = vmatpush1.msra.mxu0 %v160
      %172 = vmatprep.subr.mxu0 0.0
      %173 = vmatpush1.msra.mxu0 0.0
      %174 = vmatprep.subr.mxu0 0.0
      %175 = vmatpush1.msra.mxu0 0.0
      %176 = vmatprep.subr.mxu0 0.0
      %177 = vmatpush1.msra.mxu0 0.0
      %178 = vmatprep.subr.mxu0 0.0
      %179 = vmatpush1.msra.mxu0 0.0
      %180 = vmatprep.subr.mxu0 0.0
      %181 = vmatpush1.msra.mxu0 0.0
      %182 = vmatprep.subr.mxu0 0.0
      %183 = vmatpush1.msra.mxu0 0.0
      %184 = vmatprep.subr.mxu0 0.0
      %185 = vmatpush1.msra.mxu0 0.0
      %186 = vmatprep.subr.mxu0 0.0
      %187 = vmatpush1.msra.mxu0 0.0
      %188 = vmatprep.subr.mxu0 0.0
      %189 = vmatpush1.msra.mxu0 0.0
      %190 = vmatprep.subr.mxu0 0.0
      %191 = vmatpush1.msra.mxu0 0.0
      %192 = vmatprep.subr.mxu0 0.0
      %193 = vmatpush1.msra.mxu0 0.0
      %194 = vmatprep.subr.mxu0 0.0
      %195 = vmatpush1.msra.mxu0 0.0
      %196 = vmatprep.subr.mxu0 0.0
      %197 = vmatpush1.msra.mxu0 0.0
      %198 = vmatprep.subr.mxu0 0.0
      %199 = vmatpush1.msra.mxu0 0.0
      %200 = vmatprep.subr.mxu0 0.0
      %201 = vmatpush1.msra.mxu0 0.0
      %202 = vmatprep.subr.mxu0 0.0
      %203 = vmatpush1.msra.mxu0 0.0
      %204 = vmatprep.subr.mxu0 0.0
      %205 = vmatpush1.msra.mxu0 0.0
      %206 = vmatprep.subr.mxu0 0.0
      %207 = vmatpush1.msra.mxu0 0.0
      %208 = vmatprep.subr.mxu0 0.0
      %209 = vmatpush1.msra.mxu0 0.0
      %210 = vmatprep.subr.mxu0 0.0
      %211 = vmatpush1.msra.mxu0 0.0
      %212 = vmatprep.subr.mxu0 0.0
      %213 = vmatpush1.msra.mxu0 0.0
      %214 = vmatprep.subr.mxu0 0.0
      %215 = vmatpush1.msra.mxu0 0.0
      %216 = vmatprep.subr.mxu0 0.0
      %217 = vmatpush1.msra.mxu0 0.0
      %218 = vmatprep.subr.mxu0 0.0
      %219 = vmatpush1.msra.mxu0 0.0
      %220 = vmatprep.subr.mxu0 0.0
      %221 = vmatpush1.msra.mxu0 0.0
      %222 = vmatprep.subr.mxu0 0.0
      %223 = vmatpush1.msra.mxu0 0.0
      %224 = vmatprep.subr.mxu0 0.0
      %225 = vmatpush1.msra.mxu0 0.0
      %226 = vmatprep.subr.mxu0 0.0
      %227 = vmatpush1.msra.mxu0 0.0
      %228 = vmatprep.subr.mxu0 0.0
      %229 = vmatpush1.msra.mxu0 0.0
      %230 = vmatprep.subr.mxu0 0.0
      %231 = vmatpush1.msra.mxu0 0.0
      %232 = vmatprep.mubr.f32.mxu0 0.0
      %233 = vmatmul.mubr.f32.gmra.mrb[0].mxu0 %v163
      %v234 = vpop.f32.mrb[0].mxu0
      %v235 = vadd.f32 0.0, %v234
      %v236 = vpop.f32.mrb[0].mxu0
      %237 = vmatprep.mubr.f32.mxu0 0.0
      %238 = vmatmul.mubr.f32.gmra.mrb[0].mxu0 %v166
      %v239 = vpop.f32.mrb[0].mxu0
      %v240 = vadd.f32 0.0, %v239
      %v241 = vpop.f32.mrb[0].mxu0
      %242 = vdwg.mxu0
      %vm243 = vcmask 64512
      %244 = vst.msk [vmem:[%s145] sm:$0xff] %vm243, %v235
      %245 = vst.msk [vmem:[%s145 + $0x8] sm:$0xff] %vm243, %v240
      %s246 = smul.u32 2, %s13
      %p247 = scmp.lt.s32.totalorder %s246, 7
      %s248 = scalar_select %p247, %s246, 7
      %s249 = smul.addr %s248, 8
      %s250 = scalar_lea.vmem %s2, %s249
      // Predicated region
      $region29: #{tpu_custom_call.1} parent=27 // pred_check
        %p251 = pneg %p78
      $region30: #{tpu_custom_call.1} parent=27 // pred_check_branch
        %253 = sbr.rel (%p251) target = $region32
      $region31: #{tpu_custom_call.1} parent=27 // pred_region
        %s254 = smul.u32 2, %s13
      $region32: #{tpu_custom_call.1} parent=27 // pred_fallthru
        _
    $region28: #{tpu_custom_call.1} parent=5 // pred_fallthru
      _
    %p255 = scmp.le.s32.totalorder 2, %s8
    // Predicated region
    $region33: #{tpu_custom_call.1} parent=5 // pred_check
      %p256 = pneg %p255
    $region34: #{tpu_custom_call.1} parent=5 // pred_check_branch
      %258 = sbr.rel (%p256) target = $region36
    $region35: #{tpu_custom_call.1} parent=5 // pred_region
      %s259 = ssub.s32 %s8, 2
      // Predicated region
      $region37: #{tpu_custom_call.1} parent=35 // pred_check
        %p260 = pneg %p84
      $region38: #{tpu_custom_call.1} parent=35 // pred_check_branch
        %262 = sbr.rel (%p260) target = $region40
      $region39: #{tpu_custom_call.1} parent=35 // pred_region
        %s263 = smul.u32 2, %s14
        %p264 = scmp.lt.s32.totalorder %s263, 7
        %s265 = scalar_select %p264, %s263, 7
        %s266 = smul.addr %s265, 8
        %s267 = scalar_lea.vmem %s2, %s266
      $region40: #{tpu_custom_call.1} parent=35 // pred_fallthru
        _
    $region36: #{tpu_custom_call.1} parent=5 // pred_fallthru
      _
  $region6: #{tpu_custom_call.1} parent=0 // loop_footer
    %s12 = sadd.s32 1, %s8
  $region7: #{tpu_custom_call.1} parent=0 // loop_footer_branch
    %7 = sbr.rel target = $region3
  $region8: #{tpu_custom_call.1} parent=0 // loop_exit
    _

</llo_original>
